<compile_context>
chip_gen: v7x
topology: tpu7x:2x2x1
jax: 0.10.0
libtpu: 0.0.40
codegen_flags: <defaults>
</compile_context>

<pallas_src>
import functools

import jax
import jax.numpy as jnp
from jax import lax
from jax.experimental import pallas as pl
from jax.experimental.pallas import tpu as pltpu

BN_EPS = 1e-5
LEAKY_SLOPE = 0.2


def _round_up(x, m):
    return ((x + m - 1) // m) * m


# --------------------------------------------------------------------------
# Pass 1: conv tile + per-channel sum / sum-of-squares (partial, per tile).
# --------------------------------------------------------------------------
def _conv_stats_kernel(p_ref, w_ref, stats_ref):
    """p_ref: (tm, K) bf16, w_ref: (K, Cp) bf16, stats_ref: (1, 2, Cp) f32."""
    conv = jnp.dot(p_ref[...], w_ref[...], preferred_element_type=jnp.float32)  # (tm, Cp)
    # Per-channel reductions pushed through the MXU (ones-row matmul) instead
    # of a cross-sublane XLU reduction.
    ones = jnp.ones((1, conv.shape[0]), dtype=jnp.float32)
    s1 = jnp.dot(ones, conv, preferred_element_type=jnp.float32)         # (1, Cp)
    s2 = jnp.dot(ones, conv * conv, preferred_element_type=jnp.float32)  # (1, Cp)
    stats_ref[...] = jnp.concatenate([s1, s2], axis=0)[None, :, :]       # (1, 2, Cp)


# --------------------------------------------------------------------------
# Pass 2: conv tile + folded BN (scale/shift FMA) + LeakyReLU.
# --------------------------------------------------------------------------
def _apply_kernel(p_ref, w_ref, scale_ref, shift_ref, o_ref):
    """p_ref: (tm, K) bf16, w_ref: (K, Cp) bf16, scale/shift: (1, Cp) f32."""
    conv = jnp.dot(p_ref[...], w_ref[...], preferred_element_type=jnp.float32)  # (tm, Cp)
    y = conv * scale_ref[...] + shift_ref[...]
    o_ref[...] = jnp.where(y > 0, y, LEAKY_SLOPE * y).astype(o_ref.dtype)


def unet_down(x_nchw, weight_oihw, gamma, beta, *, tm_max=512):
    """x_nchw: (N, Cin, H, W); weight_oihw: (Cout, Cin, 4, 4); gamma/beta: (Cout,).

    tm_max: rows of the im2col matrix per grid step.  512 is a good default
    across generations (v5e tight VMEM / v7x 64 MiB per TC); on v6e it can be
    raised to 1024-2048 together with vmem_limit_bytes.
    """
    n, cin, h, w = x_nchw.shape
    cout = weight_oihw.shape[0]
    oh, ow = h // 2, w // 2
    m = n * oh * ow
    k = 16 * cin

    # ---- im2col glue (pure data movement), kernel=4 stride=2 pad=1 ----
    x_nhwc = jnp.transpose(x_nchw, (0, 2, 3, 1))
    x_pad = jnp.pad(x_nhwc, ((0, 0), (1, 1), (1, 1), (0, 0)))
    patches = jnp.stack(
        [x_pad[:, kh:kh + 2 * oh:2, kw:kw + 2 * ow:2, :]
         for kh in range(4) for kw in range(4)],
        axis=3,
    )  # (N, OH, OW, 16, Cin) — feature order (kh, kw, cin)
    patches = patches.reshape(m, k).astype(jnp.bfloat16)  # bf16 MXU feed

    # ---- padding for lane-dense output / clean M tiling ----
    cout_p = _round_up(cout, 128)
    tm = min(tm_max, _round_up(m, 128))
    m_pad = _round_up(m, tm)
    grid_m = m_pad // tm
    patches = jnp.pad(patches, ((0, m_pad - m), (0, 0)))  # zero rows: 0-contribution to stats

    # weight[o, c, kh, kw] -> w_mat[(kh, kw, c), o], zero-padded on Cout.
    w_mat = jnp.transpose(weight_oihw, (2, 3, 1, 0)).reshape(k, cout).astype(jnp.bfloat16)
    w_mat = jnp.pad(w_mat, ((0, 0), (0, cout_p - cout)))

    parallel_m = pltpu.CompilerParams(dimension_semantics=("parallel",))

    # ---- pass 1: partial per-channel sums / sums-of-squares ----
    stats_bytes = patches.size * 2 + w_mat.size * 2 + grid_m * 2 * cout_p * 4
    stats = pl.pallas_call(
        _conv_stats_kernel,
        out_shape=jax.ShapeDtypeStruct((grid_m, 2, cout_p), jnp.float32),
        grid=(grid_m,),
        in_specs=[
            pl.BlockSpec((tm, k), lambda i: (i, 0)),
            pl.BlockSpec((k, cout_p), lambda i: (0, 0)),   # resident weights
        ],
        out_specs=pl.BlockSpec((1, 2, cout_p), lambda i: (i, 0, 0)),
        compiler_params=parallel_m,
        cost_estimate=pl.CostEstimate(
            flops=2 * m_pad * k * cout_p + 4 * m_pad * cout_p,
            transcendentals=0,
            bytes_accessed=stats_bytes,
        ),
    )(patches, w_mat)

    # ---- finalize BN statistics (tiny) and fold into scale / shift ----
    tot = jnp.sum(stats, axis=0)                       # (2, Cp)
    mean = tot[0] / m                                  # divide by *real* M
    var = jnp.maximum(tot[1] / m - mean * mean, 0.0)   # biased (training-mode) variance
    gamma_p = jnp.pad(gamma.astype(jnp.float32), (0, cout_p - cout))  # pad = 0 -> scale 0
    beta_p = jnp.pad(beta.astype(jnp.float32), (0, cout_p - cout))
    scale = gamma_p * lax.rsqrt(var + BN_EPS)
    shift = beta_p - mean * scale
    scale2 = scale.reshape(1, cout_p)
    shift2 = shift.reshape(1, cout_p)

    # ---- pass 2: conv recompute + scale/shift + LeakyReLU ----
    apply_bytes = (patches.size * 2 + w_mat.size * 2 + 2 * cout_p * 4
                   + m_pad * cout_p * 4)
    out_flat = pl.pallas_call(
        _apply_kernel,
        out_shape=jax.ShapeDtypeStruct((m_pad, cout_p), jnp.float32),
        grid=(grid_m,),
        in_specs=[
            pl.BlockSpec((tm, k), lambda i: (i, 0)),
            pl.BlockSpec((k, cout_p), lambda i: (0, 0)),   # resident weights
            pl.BlockSpec((1, cout_p), lambda i: (0, 0)),   # resident scale
            pl.BlockSpec((1, cout_p), lambda i: (0, 0)),   # resident shift
        ],
        out_specs=pl.BlockSpec((tm, cout_p), lambda i: (i, 0)),
        compiler_params=parallel_m,
        cost_estimate=pl.CostEstimate(
            flops=2 * m_pad * k * cout_p + 3 * m_pad * cout_p,
            transcendentals=0,
            bytes_accessed=apply_bytes,
        ),
    )(patches, w_mat, scale2, shift2)

    # strip padding, back to NCHW
    out = out_flat[:m, :cout].reshape(n, oh, ow, cout)
    return jnp.transpose(out, (0, 3, 1, 2))


def _reference(x_nchw, weight_oihw, gamma, beta):
    """Pure-JAX f32 reference matching the PyTorch module (training-mode BN)."""
    conv = lax.conv_general_dilated(
        x_nchw.astype(jnp.float32), weight_oihw.astype(jnp.float32),
        window_strides=(2, 2), padding=[(1, 1), (1, 1)],
        dimension_numbers=("NCHW", "OIHW", "NCHW"),
    )
    mean = jnp.mean(conv, axis=(0, 2, 3), keepdims=True)
    var = jnp.mean((conv - mean) ** 2, axis=(0, 2, 3), keepdims=True)
    xhat = (conv - mean) * lax.rsqrt(var + BN_EPS)
    y = xhat * gamma.reshape(1, -1, 1, 1) + beta.reshape(1, -1, 1, 1)
    return jnp.where(y > 0, y, LEAKY_SLOPE * y)


if __name__ == "__main__":
    key = jax.random.PRNGKey(0)
    k_x, k_w, k_g, k_b = jax.random.split(key, 4)

    N, C_IN, H, W = 2, 4, 16, 16
    C_OUT = 8

    x = jax.random.normal(k_x, (N, C_IN, H, W), dtype=jnp.float32)
    # Conv2d weight: (out, in, 4, 4), bias=False
    weight = 0.1 * jax.random.normal(k_w, (C_OUT, C_IN, 4, 4), dtype=jnp.float32)
    # BatchNorm2d affine params (deterministic, non-trivial values)
    gamma = 1.0 + 0.1 * jax.random.normal(k_g, (C_OUT,), dtype=jnp.float32)
    beta = 0.1 * jax.random.normal(k_b, (C_OUT,), dtype=jnp.float32)

    fn = jax.jit(functools.partial(unet_down, tm_max=512))
    out = jax.block_until_ready(fn(x, weight, gamma, beta))

    ref = _reference(x, weight, gamma, beta)
    assert out.shape == (N, C_OUT, H // 2, W // 2), out.shape
    # Tolerance accounts for the bf16 MXU feed (f32 accumulation, f32 BN math);
    # algorithmic errors (wrong mean/var, wrong folding) would be >> 5e-2.
    err = float(jnp.max(jnp.abs(out - ref)))
    assert jnp.allclose(out, ref, rtol=5e-2, atol=5e-2), err

    print("KERNEL_OK")
</pallas_src>

<mosaic_0001>
module attributes {stable_mosaic.version = 11 : i64} {
  func.func @_conv_stats_kernel(%arg0: i32, %arg1: memref<128x64xbf16, #tpu.memory_space<vmem>>, %arg2: memref<64x128xbf16, #tpu.memory_space<vmem>>, %arg3: memref<1x2x128xf32, #tpu.memory_space<vmem>>) attributes {dimension_semantics = [#tpu.dimension_semantics<parallel>], iteration_bounds = array<i64: 1>, scalar_prefetch = 0 : i64, scratch_operands = 0 : i64, tpu.core_type = #tpu.core_type<tc>, window_params = [{transform_indices = @transform_0, window_bounds = array<i64: 128, 64>}, {pipeline_mode = #tpu.pipeline_mode<synchronous>, transform_indices = @transform_1, window_bounds = array<i64: 64, 128>}, {transform_indices = @transform_2, window_bounds = array<i64: 1, 2, 128>}]} {
    %c0 = arith.constant 0 : index
    %c0_0 = arith.constant 0 : index
    %0 = vector.load %arg1[%c0, %c0_0] : memref<128x64xbf16, #tpu.memory_space<vmem>>, vector<128x64xbf16>
    %c0_1 = arith.constant 0 : index
    %c0_2 = arith.constant 0 : index
    %1 = vector.load %arg2[%c0_1, %c0_2] : memref<64x128xbf16, #tpu.memory_space<vmem>>, vector<64x128xbf16>
    %cst = arith.constant dense<0.000000e+00> : vector<128x128xf32>
    %2 = tpu.matmul %0, %1, %cst {dimension_numbers = #tpu.dot_dimension_numbers<[1], [0], [0], [1], [0, 0, 1, 1], [], []>} : vector<128x64xbf16>, vector<64x128xbf16>, vector<128x128xf32> -> vector<128x128xf32>
    %cst_3 = arith.constant 1.000000e+00 : f32
    %3 = vector.broadcast %cst_3 : f32 to vector<1x128xf32>
    %cst_4 = arith.constant dense<0.000000e+00> : vector<1x128xf32>
    %4 = tpu.matmul %3, %2, %cst_4 {dimension_numbers = #tpu.dot_dimension_numbers<[1], [0], [0], [1], [0, 0, 1, 1], [], []>} : vector<1x128xf32>, vector<128x128xf32>, vector<1x128xf32> -> vector<1x128xf32>
    %5 = arith.mulf %2, %2 : vector<128x128xf32>
    %cst_5 = arith.constant dense<0.000000e+00> : vector<1x128xf32>
    %6 = tpu.matmul %3, %5, %cst_5 {dimension_numbers = #tpu.dot_dimension_numbers<[1], [0], [0], [1], [0, 0, 1, 1], [], []>} : vector<1x128xf32>, vector<128x128xf32>, vector<1x128xf32> -> vector<1x128xf32>
    %7 = tpu.concatenate %4, %6 in 0 : vector<1x128xf32>, vector<1x128xf32> -> vector<2x128xf32>
    %8 = vector.shape_cast %7 : vector<2x128xf32> to vector<1x2x128xf32>
    %c0_6 = arith.constant 0 : index
    %c0_7 = arith.constant 0 : index
    %c0_8 = arith.constant 0 : index
    %9 = vector.load %arg3[%c0_6, %c0_7, %c0_8] : memref<1x2x128xf32, #tpu.memory_space<vmem>>, vector<1x2x128xf32>
    tpu.vector_store %arg3[%c0_6, %c0_7, %c0_8], %8 {strides = array<i32>} : memref<1x2x128xf32, #tpu.memory_space<vmem>>, vector<1x2x128xf32>,
    return
  }
  func.func @transform_0(%arg0: i32) -> (i32, i32) {
    %c0_i32 = arith.constant 0 : i32
    %c0_i32_0 = arith.constant 0 : i32
    return %arg0, %c0_i32 : i32, i32
  }
  func.func @transform_1(%arg0: i32) -> (i32, i32) {
    %c0_i32 = arith.constant 0 : i32
    %c0_i32_0 = arith.constant 0 : i32
    %c0_i32_1 = arith.constant 0 : i32
    return %c0_i32, %c0_i32_0 : i32, i32
  }
  func.func @transform_2(%arg0: i32) -> (i32, i32, i32) {
    %c0_i32 = arith.constant 0 : i32
    %c0_i32_0 = arith.constant 0 : i32
    %c0_i32_1 = arith.constant 0 : i32
    return %arg0, %c0_i32, %c0_i32_0 : i32, i32, i32
  }
}

module attributes {stable_mosaic.version = 11 : i64} {
  func.func @_apply_kernel(%arg0: i32, %arg1: memref<128x64xbf16, #tpu.memory_space<vmem>>, %arg2: memref<64x128xbf16, #tpu.memory_space<vmem>>, %arg3: memref<1x128xf32, #tpu.memory_space<vmem>>, %arg4: memref<1x128xf32, #tpu.memory_space<vmem>>, %arg5: memref<128x128xf32, #tpu.memory_space<vmem>>) attributes {dimension_semantics = [#tpu.dimension_semantics<parallel>], iteration_bounds = array<i64: 1>, scalar_prefetch = 0 : i64, scratch_operands = 0 : i64, tpu.core_type = #tpu.core_type<tc>, window_params = [{transform_indices = @transform_0, window_bounds = array<i64: 128, 64>}, {pipeline_mode = #tpu.pipeline_mode<synchronous>, transform_indices = @transform_1, window_bounds = array<i64: 64, 128>}, {pipeline_mode = #tpu.pipeline_mode<synchronous>, transform_indices = @transform_2, window_bounds = array<i64: 1, 128>}, {pipeline_mode = #tpu.pipeline_mode<synchronous>, transform_indices = @transform_3, window_bounds = array<i64: 1, 128>}, {transform_indices = @transform_4, window_bounds = array<i64: 128, 128>}]} {
    %c0 = arith.constant 0 : index
    %c0_0 = arith.constant 0 : index
    %0 = vector.load %arg1[%c0, %c0_0] : memref<128x64xbf16, #tpu.memory_space<vmem>>, vector<128x64xbf16>
    %c0_1 = arith.constant 0 : index
    %c0_2 = arith.constant 0 : index
    %1 = vector.load %arg2[%c0_1, %c0_2] : memref<64x128xbf16, #tpu.memory_space<vmem>>, vector<64x128xbf16>
    %cst = arith.constant dense<0.000000e+00> : vector<128x128xf32>
    %2 = tpu.matmul %0, %1, %cst {dimension_numbers = #tpu.dot_dimension_numbers<[1], [0], [0], [1], [0, 0, 1, 1], [], []>} : vector<128x64xbf16>, vector<64x128xbf16>, vector<128x128xf32> -> vector<128x128xf32>
    %c0_3 = arith.constant 0 : index
    %c0_4 = arith.constant 0 : index
    %3 = vector.load %arg3[%c0_3, %c0_4] : memref<1x128xf32, #tpu.memory_space<vmem>>, vector<1x128xf32>
    %4 = vector.broadcast %3 : vector<1x128xf32> to vector<128x128xf32>
    %5 = arith.mulf %2, %4 : vector<128x128xf32>
    %c0_5 = arith.constant 0 : index
    %c0_6 = arith.constant 0 : index
    %6 = vector.load %arg4[%c0_5, %c0_6] : memref<1x128xf32, #tpu.memory_space<vmem>>, vector<1x128xf32>
    %7 = vector.broadcast %6 : vector<1x128xf32> to vector<128x128xf32>
    %8 = arith.addf %5, %7 : vector<128x128xf32>
    %cst_7 = arith.constant 0.000000e+00 : f32
    %9 = vector.broadcast %cst_7 : f32 to vector<128x128xf32>
    %10 = arith.cmpf ogt, %8, %9 : vector<128x128xf32>
    %cst_8 = arith.constant 2.000000e-01 : f32
    %11 = vector.broadcast %cst_8 : f32 to vector<128x128xf32>
    %12 = arith.mulf %11, %8 : vector<128x128xf32>
    %13 = arith.select %10, %8, %12 : vector<128x128xi1>, vector<128x128xf32>
    %c0_9 = arith.constant 0 : index
    %c0_10 = arith.constant 0 : index
    %14 = vector.load %arg5[%c0_9, %c0_10] : memref<128x128xf32, #tpu.memory_space<vmem>>, vector<128x128xf32>
    tpu.vector_store %arg5[%c0_9, %c0_10], %13 {strides = array<i32>} : memref<128x128xf32, #tpu.memory_space<vmem>>, vector<128x128xf32>,
    return
  }
  func.func @transform_0(%arg0: i32) -> (i32, i32) {
    %c0_i32 = arith.constant 0 : i32
    %c0_i32_0 = arith.constant 0 : i32
    return %arg0, %c0_i32 : i32, i32
  }
  func.func @transform_1(%arg0: i32) -> (i32, i32) {
    %c0_i32 = arith.constant 0 : i32
    %c0_i32_0 = arith.constant 0 : i32
    %c0_i32_1 = arith.constant 0 : i32
    return %c0_i32, %c0_i32_0 : i32, i32
  }
  func.func @transform_2(%arg0: i32) -> (i32, i32) {
    %c0_i32 = arith.constant 0 : i32
    %c0_i32_0 = arith.constant 0 : i32
    %c0_i32_1 = arith.constant 0 : i32
    return %c0_i32, %c0_i32_0 : i32, i32
  }
  func.func @transform_3(%arg0: i32) -> (i32, i32) {
    %c0_i32 = arith.constant 0 : i32
    %c0_i32_0 = arith.constant 0 : i32
    %c0_i32_1 = arith.constant 0 : i32
    return %c0_i32, %c0_i32_0 : i32, i32
  }
  func.func @transform_4(%arg0: i32) -> (i32, i32) {
    %c0_i32 = arith.constant 0 : i32
    %c0_i32_0 = arith.constant 0 : i32
    return %arg0, %c0_i32 : i32, i32
  }
}

</mosaic_0001>

<llo_original>
// kernel: unet_down.3
$region0: #{unet_down.3}
  #allocation0 [shape = 'u32[]', space=smem, size = 0x4, offset = 0x4, fixed_abs, tag = 'smem constant byte address 0x4 - core index']
  #allocation1 [shape = 'u32[144,128]{1,0:T(1,128)}', space=vmem, size = 0x12000, scoped, tag = 'internal scratch']
  %s0 = inlined_call_operand.vmem [shape: bf16[128,64], index: 0, kind: input, shape index: {}]
  %s1 = inlined_call_operand.vmem [shape: bf16[64,128], index: 1, kind: input, shape index: {}]
  %s2 = inlined_call_operand.vmem [shape: f32[1,128], index: 2, kind: input, shape index: {}]
  %s3 = inlined_call_operand.vmem [shape: f32[1,128], index: 3, kind: input, shape index: {}]
  %s4 = inlined_call_operand.vmem [shape: f32[128,128], index: 4, kind: output, shape index: {}]
  %s5 = sld [smem:[#allocation0]]
  $region26: #{unet_down.3} parent=0
    _
  %s7 = ssub.s32 1, %s5
  %s8 = scalar_select 0, %s7, %s5
  // Predicated region
  $region2: #{unet_down.3} parent=0 // pred_check
    _
  $region3: #{unet_down.3} parent=0 // pred_check_branch
    %10 = sbr.rel (0) target = $region5
  $region4: #{unet_down.3} parent=0 // pred_region
    _
  $region5: #{unet_down.3} parent=0 // pred_fallthru
    _
  // Predicated region
  $region6: #{unet_down.3} parent=0 // pred_check
    _
  $region7: #{unet_down.3} parent=0 // pred_check_branch
    %12 = sbr.rel (0) target = $region9
  $region8: #{unet_down.3} parent=0 // pred_region
    _
  $region9: #{unet_down.3} parent=0 // pred_fallthru
    _
  // Predicated region
  $region10: #{unet_down.3} parent=0 // pred_check
    _
  $region11: #{unet_down.3} parent=0 // pred_check_branch
    %14 = sbr.rel (0) target = $region13
  $region12: #{unet_down.3} parent=0 // pred_region
    _
  $region13: #{unet_down.3} parent=0 // pred_fallthru
    _
  // Predicated region
  $region14: #{unet_down.3} parent=0 // pred_check
    _
  $region15: #{unet_down.3} parent=0 // pred_check_branch
    %16 = sbr.rel (0) target = $region17
  $region16: #{unet_down.3} parent=0 // pred_region
    _
  $region17: #{unet_down.3} parent=0 // pred_fallthru
    _
  %v18 = vld [vmem:[%s0] sm:$0xf]
  %v19 = vld [vmem:[%s0 + $0x4] sm:$0xf]
  %v20 = vld [vmem:[%s0 + $0x8] sm:$0xf]
  %v21 = vld [vmem:[%s0 + $0xc] sm:$0xf]
  %v22 = vld [vmem:[%s0 + $0x10] sm:$0xf]
  %v23 = vld [vmem:[%s0 + $0x14] sm:$0xf]
  %v24 = vld [vmem:[%s0 + $0x18] sm:$0xf]
  %v25 = vld [vmem:[%s0 + $0x1c] sm:$0xf]
  %v26 = vld [vmem:[%s0 + $0x20] sm:$0xf]
  %v27 = vld [vmem:[%s0 + $0x24] sm:$0xf]
  %v28 = vld [vmem:[%s0 + $0x28] sm:$0xf]
  %v29 = vld [vmem:[%s0 + $0x2c] sm:$0xf]
  %v30 = vld [vmem:[%s0 + $0x30] sm:$0xf]
  %v31 = vld [vmem:[%s0 + $0x34] sm:$0xf]
  %v32 = vld [vmem:[%s0 + $0x38] sm:$0xf]
  %v33 = vld [vmem:[%s0 + $0x3c] sm:$0xf]
  %v34 = vld [vmem:[%s1] sm:$0xf]
  %v35 = vld [vmem:[%s1 + $0x4] sm:$0xf]
  %v36 = vld [vmem:[%s1 + $0x8] sm:$0xf]
  %v37 = vld [vmem:[%s1 + $0xc] sm:$0xf]
  %v38 = vld [vmem:[%s1 + $0x10] sm:$0xf]
  %v39 = vld [vmem:[%s1 + $0x14] sm:$0xf]
  %v40 = vld [vmem:[%s1 + $0x18] sm:$0xf]
  %v41 = vld [vmem:[%s1 + $0x1c] sm:$0xf]
  %v58 = vunpack.c.l.b16 %v18
  %v59 = vunpack.c.l.b16 %v19
  %v60 = vunpack.c.l.b16 %v20
  %v61 = vunpack.c.l.b16 %v21
  %v62 = vunpack.c.l.b16 %v22
  %v63 = vunpack.c.l.b16 %v23
  %v64 = vunpack.c.l.b16 %v24
  %v65 = vunpack.c.l.b16 %v25
  %v66 = vunpack.c.l.b16 %v26
  %v67 = vunpack.c.l.b16 %v27
  %v68 = vunpack.c.l.b16 %v28
  %v69 = vunpack.c.l.b16 %v29
  %v70 = vunpack.c.l.b16 %v30
  %v71 = vunpack.c.l.b16 %v31
  %v72 = vunpack.c.l.b16 %v32
  %v73 = vunpack.c.l.b16 %v33
  %v74 = vpack.c.b16 %v59, %v58
  %v75 = vpack.c.b16 %v61, %v60
  %v76 = vpack.c.b16 %v63, %v62
  %v77 = vpack.c.b16 %v65, %v64
  %v78 = vpack.c.b16 %v67, %v66
  %v79 = vpack.c.b16 %v69, %v68
  %v80 = vpack.c.b16 %v71, %v70
  %v81 = vpack.c.b16 %v73, %v72
  %v90 = vunpack.c.l.b16 %v34
  %v91 = vunpack.c.l.b16 %v35
  %v92 = vunpack.c.l.b16 %v36
  %v93 = vunpack.c.l.b16 %v37
  %v94 = vunpack.c.l.b16 %v38
  %v95 = vunpack.c.l.b16 %v39
  %v96 = vunpack.c.l.b16 %v40
  %v97 = vunpack.c.l.b16 %v41
  %v98 = vpack.c.b16 %v91, %v90
  %v99 = vpack.c.b16 %v93, %v92
  %v100 = vpack.c.b16 %v95, %v94
  %v101 = vpack.c.b16 %v97, %v96
  %vm106 = vcmask 523264
  %v108 = vsel %vm106, %v74, 0
  %v111 = vsel %vm106, %v75, 0
  %v114 = vsel %vm106, %v76, 0
  %v117 = vsel %vm106, %v77, 0
  %v120 = vsel %vm106, %v78, 0
  %v123 = vsel %vm106, %v79, 0
  %v126 = vsel %vm106, %v80, 0
  %v129 = vsel %vm106, %v81, 0
  %131 = vmatprep.subr.bf16.mxu0 0
  %132 = vmatpush1.bf16.msra.mxu0 %v98
  %133 = vmatprep.subr.bf16.mxu0 0
  %134 = vmatpush1.bf16.msra.mxu0 %v99
  %135 = vmatprep.subr.bf16.mxu0 0
  %136 = vmatpush1.bf16.msra.mxu0 %v100
  %137 = vmatprep.subr.bf16.mxu0 0
  %138 = vmatpush1.bf16.msra.mxu0 %v101
  %139 = vmatprep.subr.bf16.mxu0 0
  %140 = vmatpush1.bf16.msra.mxu0 0
  %141 = vmatprep.subr.bf16.mxu0 0
  %142 = vmatpush1.bf16.msra.mxu0 0
  %143 = vmatprep.subr.bf16.mxu0 0
  %144 = vmatpush1.bf16.msra.mxu0 0
  %145 = vmatprep.subr.bf16.mxu0 0
  %146 = vmatpush1.bf16.msra.mxu0 0
  %147 = vmatprep.subr.bf16.mxu0 0
  %148 = vmatpush1.bf16.msra.mxu0 0
  %149 = vmatprep.subr.bf16.mxu0 0
  %150 = vmatpush1.bf16.msra.mxu0 0
  %151 = vmatprep.subr.bf16.mxu0 0
  %152 = vmatpush1.bf16.msra.mxu0 0
  %153 = vmatprep.subr.bf16.mxu0 0
  %154 = vmatpush1.bf16.msra.mxu0 0
  %155 = vmatprep.subr.bf16.mxu0 0
  %156 = vmatpush1.bf16.msra.mxu0 0
  %157 = vmatprep.subr.bf16.mxu0 0
  %158 = vmatpush1.bf16.msra.mxu0 0
  %159 = vmatprep.subr.bf16.mxu0 0
  %160 = vmatpush1.bf16.msra.mxu0 0
  %161 = vmatprep.subr.bf16.mxu0 0
  %162 = vmatpush1.bf16.msra.mxu0 0
  %163 = vmatprep.mubr.bf16.mxu0 0
  %164 = vmatmul.mubr.bf16.gmra.mrb[0].mxu0 %v108
  %v165 = vpop.f32.mrb[0].mxu0
  %v166 = vadd.f32 0.0, %v165
  %v167 = vpop.f32.mrb[0].mxu0
  %v168 = vpop.f32.mrb[0].mxu0
  %v169 = vadd.f32 0.0, %v168
  %v170 = vpop.f32.mrb[0].mxu0
  %171 = vmatprep.mubr.bf16.mxu0 0
  %172 = vmatmul.mubr.bf16.gmra.mrb[0].mxu0 %v111
  %v173 = vpop.f32.mrb[0].mxu0
  %v174 = vadd.f32 0.0, %v173
  %v175 = vpop.f32.mrb[0].mxu0
  %v176 = vpop.f32.mrb[0].mxu0
  %v177 = vadd.f32 0.0, %v176
  %v178 = vpop.f32.mrb[0].mxu0
  %179 = vmatprep.mubr.bf16.mxu0 0
  %180 = vmatmul.mubr.bf16.gmra.mrb[0].mxu0 %v114
  %v181 = vpop.f32.mrb[0].mxu0
  %v182 = vadd.f32 0.0, %v181
  %v183 = vpop.f32.mrb[0].mxu0
  %v184 = vpop.f32.mrb[0].mxu0
  %v185 = vadd.f32 0.0, %v184
  %v186 = vpop.f32.mrb[0].mxu0
  %187 = vmatprep.mubr.bf16.mxu0 0
  %188 = vmatmul.mubr.bf16.gmra.mrb[0].mxu0 %v117
  %v189 = vpop.f32.mrb[0].mxu0
  %v190 = vadd.f32 0.0, %v189
  %v191 = vpop.f32.mrb[0].mxu0
  %v192 = vpop.f32.mrb[0].mxu0
  %v193 = vadd.f32 0.0, %v192
  %v194 = vpop.f32.mrb[0].mxu0
  %195 = vmatprep.mubr.bf16.mxu0 0
  %196 = vmatmul.mubr.bf16.gmra.mrb[0].mxu0 %v120
  %v197 = vpop.f32.mrb[0].mxu0
  %v198 = vadd.f32 0.0, %v197
  %v199 = vpop.f32.mrb[0].mxu0
  %v200 = vpop.f32.mrb[0].mxu0
  %v201 = vadd.f32 0.0, %v200
  %v202 = vpop.f32.mrb[0].mxu0
  %203 = vmatprep.mubr.bf16.mxu0 0
  %204 = vmatmul.mubr.bf16.gmra.mrb[0].mxu0 %v123
  %v205 = vpop.f32.mrb[0].mxu0
  %v206 = vadd.f32 0.0, %v205
  %v207 = vpop.f32.mrb[0].mxu0
  %v208 = vpop.f32.mrb[0].mxu0
  %v209 = vadd.f32 0.0, %v208
  %v210 = vpop.f32.mrb[0].mxu0
  %211 = vmatprep.mubr.bf16.mxu0 0
  %212 = vmatmul.mubr.bf16.gmra.mrb[0].mxu0 %v126
  %v213 = vpop.f32.mrb[0].mxu0
  %v214 = vadd.f32 0.0, %v213
  %v215 = vpop.f32.mrb[0].mxu0
  %v216 = vpop.f32.mrb[0].mxu0
  %v217 = vadd.f32 0.0, %v216
  %v218 = vpop.f32.mrb[0].mxu0
  %219 = vmatprep.mubr.bf16.mxu0 0
  %220 = vmatmul.mubr.bf16.gmra.mrb[0].mxu0 %v129
  %v221 = vpop.f32.mrb[0].mxu0
  %v222 = vadd.f32 0.0, %v221
  %v223 = vpop.f32.mrb[0].mxu0
  %v224 = vpop.f32.mrb[0].mxu0
  %v225 = vadd.f32 0.0, %v224
  %v226 = vpop.f32.mrb[0].mxu0
  %227 = vdwg.mxu0
  %v228 = vld [vmem:[%s2] sm:$0x1]
  %v230 = vlaneseq
  %v231 = vshrl.u32 %v230, 7
  %v232 = vsub.s32 0, %v231
  %v233 = vrot.slane %v228, %v232
  %v235 = vmul.f32 %v166, %v233
  %v236 = vmul.f32 %v169, %v233
  %v237 = vmul.f32 %v174, %v233
  %v238 = vmul.f32 %v177, %v233
  %v239 = vmul.f32 %v182, %v233
  %v240 = vmul.f32 %v185, %v233
  %v241 = vmul.f32 %v190, %v233
  %v242 = vmul.f32 %v193, %v233
  %v243 = vmul.f32 %v198, %v233
  %v244 = vmul.f32 %v201, %v233
  %v245 = vmul.f32 %v206, %v233
  %v246 = vmul.f32 %v209, %v233
  %v247 = vmul.f32 %v214, %v233
  %v248 = vmul.f32 %v217, %v233
  %v249 = vmul.f32 %v222, %v233
  %v250 = vmul.f32 %v225, %v233
  %v251 = vld [vmem:[%s3] sm:$0x1]
  %v253 = vlaneseq
  %v254 = vshrl.u32 %v253, 7
  %v255 = vsub.s32 0, %v254
  %v256 = vrot.slane %v251, %v255
  %v258 = vadd.f32 %v235, %v256
  %v259 = vadd.f32 %v236, %v256
  %v260 = vadd.f32 %v237, %v256
  %v261 = vadd.f32 %v238, %v256
  %v262 = vadd.f32 %v239, %v256
  %v263 = vadd.f32 %v240, %v256
  %v264 = vadd.f32 %v241, %v256
  %v265 = vadd.f32 %v242, %v256
  %v266 = vadd.f32 %v243, %v256
  %v267 = vadd.f32 %v244, %v256
  %v268 = vadd.f32 %v245, %v256
  %v269 = vadd.f32 %v246, %v256
  %v270 = vadd.f32 %v247, %v256
  %v271 = vadd.f32 %v248, %v256
  %v272 = vadd.f32 %v249, %v256
  %v273 = vadd.f32 %v250, %v256
  %vm274 = vcmp.gt.f32.partialorder %v258, 0.0
  %vm275 = vcmp.gt.f32.partialorder %v259, 0.0
  %vm276 = vcmp.gt.f32.partialorder %v260, 0.0
  %vm277 = vcmp.gt.f32.partialorder %v261, 0.0
  %vm278 = vcmp.gt.f32.partialorder %v262, 0.0
  %vm279 = vcmp.gt.f32.partialorder %v263, 0.0
  %vm280 = vcmp.gt.f32.partialorder %v264, 0.0
  %vm281 = vcmp.gt.f32.partialorder %v265, 0.0
  %vm282 = vcmp.gt.f32.partialorder %v266, 0.0
  %vm283 = vcmp.gt.f32.partialorder %v267, 0.0
  %vm284 = vcmp.gt.f32.partialorder %v268, 0.0
  %vm285 = vcmp.gt.f32.partialorder %v269, 0.0
  %vm286 = vcmp.gt.f32.partialorder %v270, 0.0
  %vm287 = vcmp.gt.f32.partialorder %v271, 0.0
  %vm288 = vcmp.gt.f32.partialorder %v272, 0.0
  %vm289 = vcmp.gt.f32.partialorder %v273, 0.0
  %v290 = vmul.f32 %v258, 0.2
  %v291 = vmul.f32 %v259, 0.2
  %v292 = vmul.f32 %v260, 0.2
  %v293 = vmul.f32 %v261, 0.2
  %v294 = vmul.f32 %v262, 0.2
  %v295 = vmul.f32 %v263, 0.2
  %v296 = vmul.f32 %v264, 0.2
  %v297 = vmul.f32 %v265, 0.2
  %v298 = vmul.f32 %v266, 0.2
  %v299 = vmul.f32 %v267, 0.2
  %v300 = vmul.f32 %v268, 0.2
  %v301 = vmul.f32 %v269, 0.2
  %v302 = vmul.f32 %v270, 0.2
  %v303 = vmul.f32 %v271, 0.2
  %v304 = vmul.f32 %v272, 0.2
  %v305 = vmul.f32 %v273, 0.2
  %v306 = vsel %vm274, %v258, %v290
  %v307 = vsel %vm275, %v259, %v291
  %v308 = vsel %vm276, %v260, %v292
  %v309 = vsel %vm277, %v261, %v293
  %v310 = vsel %vm278, %v262, %v294
  %v311 = vsel %vm279, %v263, %v295
  %v312 = vsel %vm280, %v264, %v296
  %v313 = vsel %vm281, %v265, %v297
  %v314 = vsel %vm282, %v266, %v298
  %v315 = vsel %vm283, %v267, %v299
  %v316 = vsel %vm284, %v268, %v300
  %v317 = vsel %vm285, %v269, %v301
  %v318 = vsel %vm286, %v270, %v302
  %v319 = vsel %vm287, %v271, %v303
  %v320 = vsel %vm288, %v272, %v304
  %v321 = vsel %vm289, %v273, %v305
  %322 = vst [vmem:[%s4] sm:$0xff] %v306
  %323 = vst [vmem:[%s4 + $0x8] sm:$0xff] %v307
  %324 = vst [vmem:[%s4 + $0x10] sm:$0xff] %v308
  %325 = vst [vmem:[%s4 + $0x18] sm:$0xff] %v309
  %326 = vst [vmem:[%s4 + $0x20] sm:$0xff] %v310
  %327 = vst [vmem:[%s4 + $0x28] sm:$0xff] %v311
  %328 = vst [vmem:[%s4 + $0x30] sm:$0xff] %v312
  %329 = vst [vmem:[%s4 + $0x38] sm:$0xff] %v313
  %330 = vst [vmem:[%s4 + $0x40] sm:$0xff] %v314
  %331 = vst [vmem:[%s4 + $0x48] sm:$0xff] %v315
  %332 = vst [vmem:[%s4 + $0x50] sm:$0xff] %v316
  %333 = vst [vmem:[%s4 + $0x58] sm:$0xff] %v317
  %334 = vst [vmem:[%s4 + $0x60] sm:$0xff] %v318
  %335 = vst [vmem:[%s4 + $0x68] sm:$0xff] %v319
  %336 = vst [vmem:[%s4 + $0x70] sm:$0xff] %v320
  %337 = vst [vmem:[%s4 + $0x78] sm:$0xff] %v321
  // Predicated region
  $region18: #{unet_down.3} parent=0 // pred_check
    _
  $region19: #{unet_down.3} parent=0 // pred_check_branch
    %339 = sbr.rel (0) target = $region21
  $region20: #{unet_down.3} parent=0 // pred_region
    _
  $region21: #{unet_down.3} parent=0 // pred_fallthru
    _
  // Predicated region
  $region22: #{unet_down.3} parent=0 // pred_check
    _
  $region23: #{unet_down.3} parent=0 // pred_check_branch
    %341 = sbr.rel (0) target = $region25
  $region24: #{unet_down.3} parent=0 // pred_region
    _
  $region25: #{unet_down.3} parent=0 // pred_fallthru
    _

// kernel: unet_down.2
$region0: #{unet_down.2}
  #allocation0 [shape = 'u32[]', space=smem, size = 0x4, offset = 0x4, fixed_abs, tag = 'smem constant byte address 0x4 - core index']
  #allocation1 [shape = 'u32[144,128]{1,0:T(1,128)}', space=vmem, size = 0x12000, scoped, tag = 'internal scratch']
  %s0 = inlined_call_operand.vmem [shape: bf16[128,64], index: 0, kind: input, shape index: {}]
  %s1 = inlined_call_operand.vmem [shape: bf16[64,128], index: 1, kind: input, shape index: {}]
  %s2 = inlined_call_operand.vmem [shape: f32[1,2,128], index: 2, kind: output, shape index: {}]
  %s3 = sld [smem:[#allocation0]]
  $region18: #{unet_down.2} parent=0
    _
  %s5 = ssub.s32 1, %s3
  %s6 = scalar_select 0, %s5, %s3
  // Predicated region
  $region2: #{unet_down.2} parent=0 // pred_check
    _
  $region3: #{unet_down.2} parent=0 // pred_check_branch
    %8 = sbr.rel (0) target = $region5
  $region4: #{unet_down.2} parent=0 // pred_region
    _
  $region5: #{unet_down.2} parent=0 // pred_fallthru
    _
  // Predicated region
  $region6: #{unet_down.2} parent=0 // pred_check
    _
  $region7: #{unet_down.2} parent=0 // pred_check_branch
    %10 = sbr.rel (0) target = $region9
  $region8: #{unet_down.2} parent=0 // pred_region
    _
  $region9: #{unet_down.2} parent=0 // pred_fallthru
    _
  %v12 = vld [vmem:[%s0] sm:$0xf]
  %v13 = vld [vmem:[%s0 + $0x4] sm:$0xf]
  %v14 = vld [vmem:[%s0 + $0x8] sm:$0xf]
  %v15 = vld [vmem:[%s0 + $0xc] sm:$0xf]
  %v16 = vld [vmem:[%s0 + $0x10] sm:$0xf]
  %v17 = vld [vmem:[%s0 + $0x14] sm:$0xf]
  %v18 = vld [vmem:[%s0 + $0x18] sm:$0xf]
  %v19 = vld [vmem:[%s0 + $0x1c] sm:$0xf]
  %v20 = vld [vmem:[%s0 + $0x20] sm:$0xf]
  %v21 = vld [vmem:[%s0 + $0x24] sm:$0xf]
  %v22 = vld [vmem:[%s0 + $0x28] sm:$0xf]
  %v23 = vld [vmem:[%s0 + $0x2c] sm:$0xf]
  %v24 = vld [vmem:[%s0 + $0x30] sm:$0xf]
  %v25 = vld [vmem:[%s0 + $0x34] sm:$0xf]
  %v26 = vld [vmem:[%s0 + $0x38] sm:$0xf]
  %v27 = vld [vmem:[%s0 + $0x3c] sm:$0xf]
  %v28 = vld [vmem:[%s1] sm:$0xf]
  %v29 = vld [vmem:[%s1 + $0x4] sm:$0xf]
  %v30 = vld [vmem:[%s1 + $0x8] sm:$0xf]
  %v31 = vld [vmem:[%s1 + $0xc] sm:$0xf]
  %v32 = vld [vmem:[%s1 + $0x10] sm:$0xf]
  %v33 = vld [vmem:[%s1 + $0x14] sm:$0xf]
  %v34 = vld [vmem:[%s1 + $0x18] sm:$0xf]
  %v35 = vld [vmem:[%s1 + $0x1c] sm:$0xf]
  %v52 = vunpack.c.l.b16 %v12
  %v53 = vunpack.c.l.b16 %v13
  %v54 = vunpack.c.l.b16 %v14
  %v55 = vunpack.c.l.b16 %v15
  %v56 = vunpack.c.l.b16 %v16
  %v57 = vunpack.c.l.b16 %v17
  %v58 = vunpack.c.l.b16 %v18
  %v59 = vunpack.c.l.b16 %v19
  %v60 = vunpack.c.l.b16 %v20
  %v61 = vunpack.c.l.b16 %v21
  %v62 = vunpack.c.l.b16 %v22
  %v63 = vunpack.c.l.b16 %v23
  %v64 = vunpack.c.l.b16 %v24
  %v65 = vunpack.c.l.b16 %v25
  %v66 = vunpack.c.l.b16 %v26
  %v67 = vunpack.c.l.b16 %v27
  %v68 = vpack.c.b16 %v53, %v52
  %v69 = vpack.c.b16 %v55, %v54
  %v70 = vpack.c.b16 %v57, %v56
  %v71 = vpack.c.b16 %v59, %v58
  %v72 = vpack.c.b16 %v61, %v60
  %v73 = vpack.c.b16 %v63, %v62
  %v74 = vpack.c.b16 %v65, %v64
  %v75 = vpack.c.b16 %v67, %v66
  %v84 = vunpack.c.l.b16 %v28
  %v85 = vunpack.c.l.b16 %v29
  %v86 = vunpack.c.l.b16 %v30
  %v87 = vunpack.c.l.b16 %v31
  %v88 = vunpack.c.l.b16 %v32
  %v89 = vunpack.c.l.b16 %v33
  %v90 = vunpack.c.l.b16 %v34
  %v91 = vunpack.c.l.b16 %v35
  %v92 = vpack.c.b16 %v85, %v84
  %v93 = vpack.c.b16 %v87, %v86
  %v94 = vpack.c.b16 %v89, %v88
  %v95 = vpack.c.b16 %v91, %v90
  %vm100 = vcmask 523264
  %v102 = vsel %vm100, %v68, 0
  %v105 = vsel %vm100, %v69, 0
  %v108 = vsel %vm100, %v70, 0
  %v111 = vsel %vm100, %v71, 0
  %v114 = vsel %vm100, %v72, 0
  %v117 = vsel %vm100, %v73, 0
  %v120 = vsel %vm100, %v74, 0
  %v123 = vsel %vm100, %v75, 0
  %125 = vmatprep.subr.bf16.mxu0 0
  %126 = vmatpush1.bf16.msra.mxu0 %v92
  %127 = vmatprep.subr.bf16.mxu0 0
  %128 = vmatpush1.bf16.msra.mxu0 %v93
  %129 = vmatprep.subr.bf16.mxu0 0
  %130 = vmatpush1.bf16.msra.mxu0 %v94
  %131 = vmatprep.subr.bf16.mxu0 0
  %132 = vmatpush1.bf16.msra.mxu0 %v95
  %133 = vmatprep.subr.bf16.mxu0 0
  %134 = vmatpush1.bf16.msra.mxu0 0
  %135 = vmatprep.subr.bf16.mxu0 0
  %136 = vmatpush1.bf16.msra.mxu0 0
  %137 = vmatprep.subr.bf16.mxu0 0
  %138 = vmatpush1.bf16.msra.mxu0 0
  %139 = vmatprep.subr.bf16.mxu0 0
  %140 = vmatpush1.bf16.msra.mxu0 0
  %141 = vmatprep.subr.bf16.mxu0 0
  %142 = vmatpush1.bf16.msra.mxu0 0
  %143 = vmatprep.subr.bf16.mxu0 0
  %144 = vmatpush1.bf16.msra.mxu0 0
  %145 = vmatprep.subr.bf16.mxu0 0
  %146 = vmatpush1.bf16.msra.mxu0 0
  %147 = vmatprep.subr.bf16.mxu0 0
  %148 = vmatpush1.bf16.msra.mxu0 0
  %149 = vmatprep.subr.bf16.mxu0 0
  %150 = vmatpush1.bf16.msra.mxu0 0
  %151 = vmatprep.subr.bf16.mxu0 0
  %152 = vmatpush1.bf16.msra.mxu0 0
  %153 = vmatprep.subr.bf16.mxu0 0
  %154 = vmatpush1.bf16.msra.mxu0 0
  %155 = vmatprep.subr.bf16.mxu0 0
  %156 = vmatpush1.bf16.msra.mxu0 0
  %157 = vmatprep.mubr.bf16.mxu0 0
  %158 = vmatmul.mubr.bf16.gmra.mrb[0].mxu0 %v102
  %v159 = vpop.f32.mrb[0].mxu0
  %v160 = vadd.f32 0.0, %v159
  %v161 = vpop.f32.mrb[0].mxu0
  %v162 = vpop.f32.mrb[0].mxu0
  %v163 = vadd.f32 0.0, %v162
  %v164 = vpop.f32.mrb[0].mxu0
  %165 = vmatprep.mubr.bf16.mxu0 0
  %166 = vmatmul.mubr.bf16.gmra.mrb[0].mxu0 %v105
  %v167 = vpop.f32.mrb[0].mxu0
  %v168 = vadd.f32 0.0, %v167
  %v169 = vpop.f32.mrb[0].mxu0
  %v170 = vpop.f32.mrb[0].mxu0
  %v171 = vadd.f32 0.0, %v170
  %v172 = vpop.f32.mrb[0].mxu0
  %173 = vmatprep.mubr.bf16.mxu0 0
  %174 = vmatmul.mubr.bf16.gmra.mrb[0].mxu0 %v108
  %v175 = vpop.f32.mrb[0].mxu0
  %v176 = vadd.f32 0.0, %v175
  %v177 = vpop.f32.mrb[0].mxu0
  %v178 = vpop.f32.mrb[0].mxu0
  %v179 = vadd.f32 0.0, %v178
  %v180 = vpop.f32.mrb[0].mxu0
  %181 = vmatprep.mubr.bf16.mxu0 0
  %182 = vmatmul.mubr.bf16.gmra.mrb[0].mxu0 %v111
  %v183 = vpop.f32.mrb[0].mxu0
  %v184 = vadd.f32 0.0, %v183
  %v185 = vpop.f32.mrb[0].mxu0
  %v186 = vpop.f32.mrb[0].mxu0
  %v187 = vadd.f32 0.0, %v186
  %v188 = vpop.f32.mrb[0].mxu0
  %189 = vmatprep.mubr.bf16.mxu0 0
  %190 = vmatmul.mubr.bf16.gmra.mrb[0].mxu0 %v114
  %v191 = vpop.f32.mrb[0].mxu0
  %v192 = vadd.f32 0.0, %v191
  %v193 = vpop.f32.mrb[0].mxu0
  %v194 = vpop.f32.mrb[0].mxu0
  %v195 = vadd.f32 0.0, %v194
  %v196 = vpop.f32.mrb[0].mxu0
  %197 = vmatprep.mubr.bf16.mxu0 0
  %198 = vmatmul.mubr.bf16.gmra.mrb[0].mxu0 %v117
  %v199 = vpop.f32.mrb[0].mxu0
  %v200 = vadd.f32 0.0, %v199
  %v201 = vpop.f32.mrb[0].mxu0
  %v202 = vpop.f32.mrb[0].mxu0
  %v203 = vadd.f32 0.0, %v202
  %v204 = vpop.f32.mrb[0].mxu0
  %205 = vmatprep.mubr.bf16.mxu0 0
  %206 = vmatmul.mubr.bf16.gmra.mrb[0].mxu0 %v120
  %v207 = vpop.f32.mrb[0].mxu0
  %v208 = vadd.f32 0.0, %v207
  %v209 = vpop.f32.mrb[0].mxu0
  %v210 = vpop.f32.mrb[0].mxu0
  %v211 = vadd.f32 0.0, %v210
  %v212 = vpop.f32.mrb[0].mxu0
  %213 = vmatprep.mubr.bf16.mxu0 0
  %214 = vmatmul.mubr.bf16.gmra.mrb[0].mxu0 %v123
  %v215 = vpop.f32.mrb[0].mxu0
  %v216 = vadd.f32 0.0, %v215
  %v217 = vpop.f32.mrb[0].mxu0
  %v218 = vpop.f32.mrb[0].mxu0
  %v219 = vadd.f32 0.0, %v218
  %v220 = vpop.f32.mrb[0].mxu0
  %221 = vdwg.mxu0
  %222 = vmatprep.subr.mxu0 0.0
  %223 = vmatpush1.msra.mxu0 %v160
  %224 = vmatprep.subr.mxu0 0.0
  %225 = vmatpush1.msra.mxu0 %v163
  %226 = vmatprep.subr.mxu0 0.0
  %227 = vmatpush1.msra.mxu0 %v168
  %228 = vmatprep.subr.mxu0 0.0
  %229 = vmatpush1.msra.mxu0 %v171
  %230 = vmatprep.subr.mxu0 0.0
  %231 = vmatpush1.msra.mxu0 %v176
  %232 = vmatprep.subr.mxu0 0.0
  %233 = vmatpush1.msra.mxu0 %v179
  %234 = vmatprep.subr.mxu0 0.0
  %235 = vmatpush1.msra.mxu0 %v184
  %236 = vmatprep.subr.mxu0 0.0
  %237 = vmatpush1.msra.mxu0 %v187
  %238 = vmatprep.subr.mxu0 0.0
  %239 = vmatpush1.msra.mxu0 %v192
  %240 = vmatprep.subr.mxu0 0.0
  %241 = vmatpush1.msra.mxu0 %v195
  %242 = vmatprep.subr.mxu0 0.0
  %243 = vmatpush1.msra.mxu0 %v200
  %244 = vmatprep.subr.mxu0 0.0
  %245 = vmatpush1.msra.mxu0 %v203
  %246 = vmatprep.subr.mxu0 0.0
  %247 = vmatpush1.msra.mxu0 %v208
  %248 = vmatprep.subr.mxu0 0.0
  %249 = vmatpush1.msra.mxu0 %v211
  %250 = vmatprep.subr.mxu0 0.0
  %251 = vmatpush1.msra.mxu0 %v216
  %252 = vmatprep.subr.mxu0 0.0
  %253 = vmatpush1.msra.mxu0 %v219
  %254 = vmatprep.subr.mxu0 0.0
  %255 = vmatpush1.msra.mxu0 0.0
  %256 = vmatprep.subr.mxu0 0.0
  %257 = vmatpush1.msra.mxu0 0.0
  %258 = vmatprep.subr.mxu0 0.0
  %259 = vmatpush1.msra.mxu0 0.0
  %260 = vmatprep.subr.mxu0 0.0
  %261 = vmatpush1.msra.mxu0 0.0
  %262 = vmatprep.subr.mxu0 0.0
  %263 = vmatpush1.msra.mxu0 0.0
  %264 = vmatprep.subr.mxu0 0.0
  %265 = vmatpush1.msra.mxu0 0.0
  %266 = vmatprep.subr.mxu0 0.0
  %267 = vmatpush1.msra.mxu0 0.0
  %268 = vmatprep.subr.mxu0 0.0
  %269 = vmatpush1.msra.mxu0 0.0
  %270 = vmatprep.subr.mxu0 0.0
  %271 = vmatpush1.msra.mxu0 0.0
  %272 = vmatprep.subr.mxu0 0.0
  %273 = vmatpush1.msra.mxu0 0.0
  %274 = vmatprep.subr.mxu0 0.0
  %275 = vmatpush1.msra.mxu0 0.0
  %276 = vmatprep.subr.mxu0 0.0
  %277 = vmatpush1.msra.mxu0 0.0
  %278 = vmatprep.subr.mxu0 0.0
  %279 = vmatpush1.msra.mxu0 0.0
  %280 = vmatprep.subr.mxu0 0.0
  %281 = vmatpush1.msra.mxu0 0.0
  %282 = vmatprep.subr.mxu0 0.0
  %283 = vmatpush1.msra.mxu0 0.0
  %284 = vmatprep.subr.mxu0 0.0
  %285 = vmatpush1.msra.mxu0 0.0
  %286 = vmatprep.mubr.f32.mxu0 0.0
  %287 = vmatmul.mubr.f32.gmra.mrb[0].mxu0 1.0
  %v288 = vpop.f32.mrb[0].mxu0
  %v289 = vadd.f32 0.0, %v288
  %v290 = vpop.f32.mrb[0].mxu0
  %291 = vdwg.mxu0
  %v292 = vmul.f32 %v160, %v160
  %v293 = vmul.f32 %v163, %v163
  %v294 = vmul.f32 %v168, %v168
  %v295 = vmul.f32 %v171, %v171
  %v296 = vmul.f32 %v176, %v176
  %v297 = vmul.f32 %v179, %v179
  %v298 = vmul.f32 %v184, %v184
  %v299 = vmul.f32 %v187, %v187
  %v300 = vmul.f32 %v192, %v192
  %v301 = vmul.f32 %v195, %v195
  %v302 = vmul.f32 %v200, %v200
  %v303 = vmul.f32 %v203, %v203
  %v304 = vmul.f32 %v208, %v208
  %v305 = vmul.f32 %v211, %v211
  %v306 = vmul.f32 %v216, %v216
  %v307 = vmul.f32 %v219, %v219
  %308 = vmatprep.subr.mxu0 0.0
  %309 = vmatpush1.msra.mxu0 %v292
  %310 = vmatprep.subr.mxu0 0.0
  %311 = vmatpush1.msra.mxu0 %v293
  %312 = vmatprep.subr.mxu0 0.0
  %313 = vmatpush1.msra.mxu0 %v294
  %314 = vmatprep.subr.mxu0 0.0
  %315 = vmatpush1.msra.mxu0 %v295
  %316 = vmatprep.subr.mxu0 0.0
  %317 = vmatpush1.msra.mxu0 %v296
  %318 = vmatprep.subr.mxu0 0.0
  %319 = vmatpush1.msra.mxu0 %v297
  %320 = vmatprep.subr.mxu0 0.0
  %321 = vmatpush1.msra.mxu0 %v298
  %322 = vmatprep.subr.mxu0 0.0
  %323 = vmatpush1.msra.mxu0 %v299
  %324 = vmatprep.subr.mxu0 0.0
  %325 = vmatpush1.msra.mxu0 %v300
  %326 = vmatprep.subr.mxu0 0.0
  %327 = vmatpush1.msra.mxu0 %v301
  %328 = vmatprep.subr.mxu0 0.0
  %329 = vmatpush1.msra.mxu0 %v302
  %330 = vmatprep.subr.mxu0 0.0
  %331 = vmatpush1.msra.mxu0 %v303
  %332 = vmatprep.subr.mxu0 0.0
  %333 = vmatpush1.msra.mxu0 %v304
  %334 = vmatprep.subr.mxu0 0.0
  %335 = vmatpush1.msra.mxu0 %v305
  %336 = vmatprep.subr.mxu0 0.0
  %337 = vmatpush1.msra.mxu0 %v306
  %338 = vmatprep.subr.mxu0 0.0
  %339 = vmatpush1.msra.mxu0 %v307
  %340 = vmatprep.subr.mxu0 0.0
  %341 = vmatpush1.msra.mxu0 0.0
  %342 = vmatprep.subr.mxu0 0.0
  %343 = vmatpush1.msra.mxu0 0.0
  %344 = vmatprep.subr.mxu0 0.0
  %345 = vmatpush1.msra.mxu0 0.0
  %346 = vmatprep.subr.mxu0 0.0
  %347 = vmatpush1.msra.mxu0 0.0
  %348 = vmatprep.subr.mxu0 0.0
  %349 = vmatpush1.msra.mxu0 0.0
  %350 = vmatprep.subr.mxu0 0.0
  %351 = vmatpush1.msra.mxu0 0.0
  %352 = vmatprep.subr.mxu0 0.0
  %353 = vmatpush1.msra.mxu0 0.0
  %354 = vmatprep.subr.mxu0 0.0
  %355 = vmatpush1.msra.mxu0 0.0
  %356 = vmatprep.subr.mxu0 0.0
  %357 = vmatpush1.msra.mxu0 0.0
  %358 = vmatprep.subr.mxu0 0.0
  %359 = vmatpush1.msra.mxu0 0.0
  %360 = vmatprep.subr.mxu0 0.0
  %361 = vmatpush1.msra.mxu0 0.0
  %362 = vmatprep.subr.mxu0 0.0
  %363 = vmatpush1.msra.mxu0 0.0
  %364 = vmatprep.subr.mxu0 0.0
  %365 = vmatpush1.msra.mxu0 0.0
  %366 = vmatprep.subr.mxu0 0.0
  %367 = vmatpush1.msra.mxu0 0.0
  %368 = vmatprep.subr.mxu0 0.0
  %369 = vmatpush1.msra.mxu0 0.0
  %370 = vmatprep.subr.mxu0 0.0
  %371 = vmatpush1.msra.mxu0 0.0
  %372 = vmatprep.mubr.f32.mxu0 0.0
  %373 = vmatmul.mubr.f32.gmra.mrb[0].mxu0 1.0
  %v374 = vpop.f32.mrb[0].mxu0
  %v375 = vadd.f32 0.0, %v374
  %v376 = vpop.f32.mrb[0].mxu0
  %377 = vdwg.mxu0
  %v379 = vrot.slane %v375, 7
  %vm381 = vcmask 1040384
  %v382 = vsel %vm381, %v289, %v379
  %383 = vst [vmem:[%s2] sm:$0x3] %v382
  // Predicated region
  $region10: #{unet_down.2} parent=0 // pred_check
    _
  $region11: #{unet_down.2} parent=0 // pred_check_branch
    %385 = sbr.rel (0) target = $region13
  $region12: #{unet_down.2} parent=0 // pred_region
    _
  $region13: #{unet_down.2} parent=0 // pred_fallthru
    _
  // Predicated region
  $region14: #{unet_down.2} parent=0 // pred_check
    _
  $region15: #{unet_down.2} parent=0 // pred_check_branch
    %387 = sbr.rel (0) target = $region17
  $region16: #{unet_down.2} parent=0 // pred_region
    _
  $region17: #{unet_down.2} parent=0 // pred_fallthru
    _

</llo_original>
